<compile_context>
chip_gen: v7x
topology: tpu7x:2x2x1
jax: 0.10.0
libtpu: 0.0.40
codegen_flags: <defaults>
</compile_context>

<pallas_src>
import functools

import jax
import jax.numpy as jnp
from jax.experimental import pallas as pl
from jax.experimental.pallas import tpu as pltpu

_INV_SQRT2 = 0.7071067811865476


def _round_up(a, b):
    return ((a + b - 1) // b) * b


def _cdiv(a, b):
    return (a + b - 1) // b


# ---------------------------------------------------------------------------
# One-time hardware / capability probes (module import time, NOT in hot path).
# ---------------------------------------------------------------------------
def _query_vmem_capacity_bytes():
    try:
        info = pltpu.get_tpu_info()
        cap = getattr(info, "vmem_capacity_bytes", None)
        if cap:
            return int(cap)
    except Exception:
        pass
    return None


_VMEM_CAPACITY = _query_vmem_capacity_bytes()
# ~80% of per-core VMEM; conservative fallback assumes a 64-MiB (v7x) part.
_VMEM_LIMIT = int(0.8 * (_VMEM_CAPACITY if _VMEM_CAPACITY else 64 * 1024 * 1024))


def _copy_probe_kernel(x_ref, o_ref):
    o_ref[...] = x_ref[...]


def _probe_buffered1():
    """Can this jax/Mosaic build lower pipeline_mode=pl.Buffered(1)?"""
    try:
        spec = pl.BlockSpec((8, 128), lambda i: (0, 0),
                            pipeline_mode=pl.Buffered(1))
        fn = pl.pallas_call(
            _copy_probe_kernel,
            out_shape=jax.ShapeDtypeStruct((8, 128), jnp.float32),
            grid_spec=pltpu.PrefetchScalarGridSpec(
                num_scalar_prefetch=0, grid=(1,),
                in_specs=[spec],
                out_specs=pl.BlockSpec((8, 128), lambda i: (0, 0))),
        )
        jax.block_until_ready(fn(jnp.zeros((8, 128), jnp.float32)))
        return True
    except Exception:
        return False


_HAS_BUFFERED1 = _probe_buffered1()


# ---------------------------------------------------------------------------
# Kernel bodies.
# ---------------------------------------------------------------------------
def _apply_gelu(h_f32, approx_gelu, compute_dtype):
    if approx_gelu:
        # tanh-approx GELU in the low-precision compute dtype: maps to the EUP
        # slot and halves the (tm, H) intermediate traffic (small numerics
        # change vs torch's exact GELU).
        return jax.nn.gelu(h_f32.astype(compute_dtype), approximate=True)
    # Exact erf GELU in f32, matching torch.nn.GELU() default.
    return 0.5 * h_f32 * (1.0 + jax.lax.erf(h_f32 * jnp.float32(_INV_SQRT2)))


def _mlp_resident_kernel(x_ref, w1_ref, b1_ref, w2_ref, b2_ref, o_ref, *,
                         approx_gelu, compute_dtype):
    # x_ref: (tm, C); w1_ref: (C, H); b1_ref: (1, H) f32; w2_ref: (H, C);
    # b2_ref: (1, C) f32.  bf16 MXU inputs, f32 accumulation.
    h = jnp.dot(x_ref[...], w1_ref[...], preferred_element_type=jnp.float32)
    h = h + b1_ref[...]
    h = _apply_gelu(h, approx_gelu, compute_dtype)
    y = jnp.dot(h.astype(w2_ref.dtype), w2_ref[...],
                preferred_element_type=jnp.float32)
    y = y + b2_ref[...]
    o_ref[...] = y.astype(o_ref.dtype)  # dropout (p=0 / eval) -> identity


def _mlp_streaming_kernel(x_ref, w1_ref, b1_ref, w2_ref, b2_ref, o_ref,
                          acc_ref, *, approx_gelu, compute_dtype):
    # Grid = (token tiles, H chunks).  W1/b1/W2 are streamed per H-chunk and
    # accumulated into an f32 (tm, C) scratch; b2 added at the last chunk.
    j = pl.program_id(1)

    @pl.when(j == 0)
    def _():
        acc_ref[...] = jnp.zeros_like(acc_ref)

    h = jnp.dot(x_ref[...], w1_ref[...], preferred_element_type=jnp.float32)
    h = h + b1_ref[...]
    h = _apply_gelu(h, approx_gelu, compute_dtype)
    acc_ref[...] += jnp.dot(h.astype(w2_ref.dtype), w2_ref[...],
                            preferred_element_type=jnp.float32)

    @pl.when(j == pl.num_programs(1) - 1)
    def _():
        o_ref[...] = (acc_ref[...] + b2_ref[...]).astype(o_ref.dtype)


# ---------------------------------------------------------------------------
# pallas_call builders (jitted + cached per shape; never rebuilt per call).
# ---------------------------------------------------------------------------
def _cost_estimate(M, C, H, compute_isz, out_isz):
    return pl.CostEstimate(
        flops=4 * M * C * H,                                   # two matmuls
        transcendentals=M * H,                                 # GELU per hidden
        bytes_accessed=(M * C * compute_isz + M * C * out_isz
                        + 2 * C * H * compute_isz + (H + C) * 4),
    )


@functools.lru_cache(maxsize=64)
def _build_resident_call(M, C, H, tm, compute_dtype_name, out_dtype_name,
                         single_buffer_weights, approx_gelu):
    compute_dtype = jnp.dtype(compute_dtype_name)
    out_dtype = jnp.dtype(out_dtype_name)
    # Grid-invariant weights/biases: single-buffer so resident weights are not
    # duplicated by the default double-buffered pipeline.
    wkw = {"pipeline_mode": pl.Buffered(1)} if single_buffer_weights else {}
    kernel = functools.partial(_mlp_resident_kernel,
                               approx_gelu=approx_gelu,
                               compute_dtype=compute_dtype)
    grid_spec = pltpu.PrefetchScalarGridSpec(
        num_scalar_prefetch=0,
        grid=(pl.cdiv(M, tm),),
        in_specs=[
            pl.BlockSpec((tm, C), lambda i: (i, 0)),          # x tile (pipelined)
            pl.BlockSpec((C, H), lambda i: (0, 0), **wkw),    # W1 (resident)
            pl.BlockSpec((1, H), lambda i: (0, 0), **wkw),    # b1
            pl.BlockSpec((H, C), lambda i: (0, 0), **wkw),    # W2 (resident)
            pl.BlockSpec((1, C), lambda i: (0, 0), **wkw),    # b2
        ],
        out_specs=pl.BlockSpec((tm, C), lambda i: (i, 0)),
    )
    call = pl.pallas_call(
        kernel,
        out_shape=jax.ShapeDtypeStruct((M, C), out_dtype),
        grid_spec=grid_spec,
        compiler_params=pltpu.CompilerParams(
            dimension_semantics=("parallel",),   # token axis: megacore-shardable
            vmem_limit_bytes=_VMEM_LIMIT,
        ),
        cost_estimate=_cost_estimate(M, C, H, compute_dtype.itemsize,
                                     out_dtype.itemsize),
    )
    return jax.jit(call)


@functools.lru_cache(maxsize=64)
def _build_streaming_call(M, C, H, tm, th, compute_dtype_name, out_dtype_name,
                          single_buffer_invariant, approx_gelu):
    compute_dtype = jnp.dtype(compute_dtype_name)
    out_dtype = jnp.dtype(out_dtype_name)
    ikw = {"pipeline_mode": pl.Buffered(1)} if single_buffer_invariant else {}
    kernel = functools.partial(_mlp_streaming_kernel,
                               approx_gelu=approx_gelu,
                               compute_dtype=compute_dtype)
    grid_spec = pltpu.PrefetchScalarGridSpec(
        num_scalar_prefetch=0,
        grid=(pl.cdiv(M, tm), H // th),
        in_specs=[
            pl.BlockSpec((tm, C), lambda i, j: (i, 0)),        # x tile
            pl.BlockSpec((C, th), lambda i, j: (0, j)),        # W1 chunk (streamed)
            pl.BlockSpec((1, th), lambda i, j: (0, j)),        # b1 chunk
            pl.BlockSpec((th, C), lambda i, j: (j, 0)),        # W2 chunk (streamed)
            pl.BlockSpec((1, C), lambda i, j: (0, 0), **ikw),  # b2 (invariant)
        ],
        out_specs=pl.BlockSpec((tm, C), lambda i, j: (i, 0)),
        scratch_shapes=[pltpu.VMEM((tm, C), jnp.float32)],
    )
    call = pl.pallas_call(
        kernel,
        out_shape=jax.ShapeDtypeStruct((M, C), out_dtype),
        grid_spec=grid_spec,
        compiler_params=pltpu.CompilerParams(
            dimension_semantics=("parallel", "arbitrary"),  # H axis is a reduction
            vmem_limit_bytes=_VMEM_LIMIT,
        ),
        cost_estimate=_cost_estimate(M, C, H, compute_dtype.itemsize,
                                     out_dtype.itemsize),
    )
    return jax.jit(call)


# ---------------------------------------------------------------------------
# VMEM footprint model & path selection.
# ---------------------------------------------------------------------------
def _resident_footprint_bytes(tm, C, H, compute_isz, out_isz, weight_buf_factor):
    weights = weight_buf_factor * 2 * C * H * compute_isz
    biases = weight_buf_factor * (H + C) * 4
    x_tiles = 2 * tm * C * compute_isz            # double-buffered x tiles
    out_tiles = 2 * tm * C * out_isz              # double-buffered out tiles
    hidden = tm * H * (4 + compute_isz)           # f32 h + its downcast copy
    return weights + biases + x_tiles + out_tiles + hidden


def _streaming_footprint_bytes(tm, C, H, th, compute_isz, out_isz):
    w_chunks = 2 * 2 * C * th * compute_isz       # W1 & W2 chunks, double-buffered
    b_chunks = 2 * th * 4 + C * 4
    x_tiles = 2 * tm * C * compute_isz
    out_tiles = 2 * tm * C * out_isz
    acc = tm * C * 4
    hidden = tm * th * (4 + compute_isz)
    return w_chunks + b_chunks + x_tiles + out_tiles + acc + hidden


def _pick_h_chunk(H, tm, C, compute_isz, out_isz, budget):
    for th in (4096, 2048, 1024, 512, 256, 128):
        if H % th == 0 and _streaming_footprint_bytes(
                tm, C, H, th, compute_isz, out_isz) <= budget:
            return th
    return None


# ---------------------------------------------------------------------------
# Public wrapper.
# ---------------------------------------------------------------------------
def mlp_pallas(x, w1, b1, w2, b2, *, tile_m=None, compute_dtype=jnp.bfloat16,
               out_dtype=None, approx_gelu=False):
    """x: [B, T, C]; w1: [C, 4C]; b1: [4C]; w2: [4C, C]; b2: [C].

    PyTorch nn.Linear stores [out, in]; pass the transposed [in, out] here.
    For best performance pre-cast w1/w2 to `compute_dtype` once (the in-call
    astype is then a no-op) and jit this wrapper.
    """
    B, T, C = x.shape
    Cw, H = w1.shape
    assert Cw == C and w2.shape == (H, C) and b1.shape[-1] == H and b2.shape[-1] == C
    M = B * T
    compute_dtype = jnp.dtype(compute_dtype)
    out_dtype = jnp.dtype(x.dtype if out_dtype is None else out_dtype)

    # Token tile: generation-aware default (bigger on 128-MiB VMEM parts),
    # multiple of 8 sublanes, clamped for tiny problems.
    if tile_m is None:
        tile_m = 512 if (_VMEM_CAPACITY or 0) >= 100 * 1024 * 1024 else 256
    tm = _round_up(min(tile_m, _round_up(M, 8)), 8)
    num_tiles = _cdiv(M, tm)
    # v7x megacore: the ("parallel",) token axis shards over 2 TensorCores;
    # prefer an even number of grid steps so neither core idles (harmless on
    # single-TC v5e/v6e).
    if num_tiles % 2 == 1 and M > 8:
        tm = max(8, _round_up(_cdiv(M, num_tiles + 1), 8))

    # Token-major 2-D slab, channels on the lane axis.  No pad / slice: any
    # partial last tile is read as garbage rows (row-local) and masked on store.
    x2d = x.reshape(M, C).astype(compute_dtype)
    w1c = w1.astype(compute_dtype)
    w2c = w2.astype(compute_dtype)
    b1f = b1.reshape(1, H).astype(jnp.float32)
    b2f = b2.reshape(1, C).astype(jnp.float32)

    budget = int(0.85 * _VMEM_LIMIT)   # headroom for Mosaic internal scratch
    # If Buffered(1) is unsupported, the default pipeline double-buffers the
    # resident weights -- account for that instead of silently overflowing VMEM.
    resident_bytes = _resident_footprint_bytes(
        tm, C, H, compute_dtype.itemsize, out_dtype.itemsize,
        weight_buf_factor=1 if _HAS_BUFFERED1 else 2)

    if resident_bytes <= budget:
        call = _build_resident_call(M, C, H, tm, compute_dtype.name,
                                    out_dtype.name, _HAS_BUFFERED1, approx_gelu)
    else:
        th = _pick_h_chunk(H, tm, C, compute_dtype.itemsize,
                           out_dtype.itemsize, budget)
        if th is None:
            # No clean H chunking available; best-effort resident path.
            call = _build_resident_call(M, C, H, tm, compute_dtype.name,
                                        out_dtype.name, _HAS_BUFFERED1,
                                        approx_gelu)
        else:
            call = _build_streaming_call(M, C, H, tm, th, compute_dtype.name,
                                         out_dtype.name, _HAS_BUFFERED1,
                                         approx_gelu)

    out2d = call(x2d, w1c, b1f, w2c, b2f)
    return out2d.reshape(B, T, C)


def mlp_reference(x, w1, b1, w2, b2, compute_dtype=None):
    """Pure-JAX reference. compute_dtype emulates the kernel's matmul dtype."""
    dt = x.dtype if compute_dtype is None else compute_dtype
    h = jnp.einsum("btc,ch->bth", x.astype(dt), w1.astype(dt),
                   preferred_element_type=jnp.float32) + b1.astype(jnp.float32)
    h = jax.nn.gelu(h, approximate=False)
    y = jnp.einsum("bth,hc->btc", h.astype(dt), w2.astype(dt),
                   preferred_element_type=jnp.float32) + b2.astype(jnp.float32)
    return y.astype(x.dtype)


if __name__ == "__main__":
    # config: n_embd=32, bias=True, dropout=0.0
    B, T, C = 2, 8, 32
    H = 4 * C

    key = jax.random.PRNGKey(0)
    kx, k1, k2, k3, k4 = jax.random.split(key, 5)

    x = jax.random.normal(kx, (B, T, C), dtype=jnp.float32)
    # PyTorch nn.Linear stores [out, in]; kernel uses the transposed [in, out].
    w1 = jax.random.normal(k1, (C, H), dtype=jnp.float32) * (C ** -0.5)
    b1 = jax.random.normal(k2, (H,), dtype=jnp.float32) * 0.02
    w2 = jax.random.normal(k3, (H, C), dtype=jnp.float32) * (H ** -0.5)
    b2 = jax.random.normal(k4, (C,), dtype=jnp.float32) * 0.02

    # Pre-cast weights to the MXU compute dtype ONCE (hoisted out of the
    # per-call path); biases stay f32.
    w1_bf16 = w1.astype(jnp.bfloat16)
    w2_bf16 = w2.astype(jnp.bfloat16)

    mlp_fn = jax.jit(mlp_pallas)
    out = mlp_fn(x, w1_bf16, b1, w2_bf16, b2)
    out = jax.block_until_ready(out)        # only in the test harness
    assert out.shape == (B, T, C)
    assert out.dtype == x.dtype

    # Second call: exercises the cached/jitted path (no re-trace, no sync).
    out2 = jax.block_until_ready(mlp_fn(x, w1_bf16, b1, w2_bf16, b2))
    assert jnp.array_equal(out, out2)

    # Tight check vs a reference with the same bf16-input / f32-accum math.
    ref_matched = mlp_reference(x, w1, b1, w2, b2, compute_dtype=jnp.bfloat16)
    assert jnp.allclose(out, ref_matched, atol=2e-3, rtol=2e-3), \
        "mismatch vs bf16-compute reference"

    # Loose sanity check vs the full-f32 reference (bf16 rounding tolerance).
    ref_f32 = mlp_reference(x, w1, b1, w2, b2)
    assert jnp.allclose(out, ref_f32, atol=1e-1, rtol=1e-1), \
        "mismatch vs f32 reference"

    print("KERNEL_OK")
</pallas_src>

<mosaic_0001>
module attributes {stable_mosaic.version = 11 : i64} {
  func.func @_copy_probe_kernel(%arg0: i32, %arg1: memref<8x128xf32, #tpu.memory_space<vmem>>, %arg2: memref<8x128xf32, #tpu.memory_space<vmem>>) attributes {dimension_semantics = [#tpu.dimension_semantics<arbitrary>], iteration_bounds = array<i64: 1>, scalar_prefetch = 0 : i64, scratch_operands = 0 : i64, tpu.core_type = #tpu.core_type<tc>, window_params = [{pipeline_mode = #tpu.pipeline_mode<synchronous>, transform_indices = @transform_0, window_bounds = array<i64: 8, 128>}, {pipeline_mode = #tpu.pipeline_mode<synchronous>, transform_indices = @transform_1, window_bounds = array<i64: 8, 128>}]} {
    %c0 = arith.constant 0 : index
    %c0_0 = arith.constant 0 : index
    %0 = vector.load %arg1[%c0, %c0_0] : memref<8x128xf32, #tpu.memory_space<vmem>>, vector<8x128xf32>
    %c0_1 = arith.constant 0 : index
    %c0_2 = arith.constant 0 : index
    %1 = vector.load %arg2[%c0_1, %c0_2] : memref<8x128xf32, #tpu.memory_space<vmem>>, vector<8x128xf32>
    tpu.vector_store %arg2[%c0_1, %c0_2], %0 {strides = array<i32>} : memref<8x128xf32, #tpu.memory_space<vmem>>, vector<8x128xf32>,
    return
  }
  func.func @transform_0(%arg0: i32) -> (i32, i32) {
    %c0_i32 = arith.constant 0 : i32
    %c0_i32_0 = arith.constant 0 : i32
    %c0_i32_1 = arith.constant 0 : i32
    return %c0_i32, %c0_i32_0 : i32, i32
  }
  func.func @transform_1(%arg0: i32) -> (i32, i32) {
    %c0_i32 = arith.constant 0 : i32
    %c0_i32_0 = arith.constant 0 : i32
    %c0_i32_1 = arith.constant 0 : i32
    return %c0_i32, %c0_i32_0 : i32, i32
  }
}

module attributes {stable_mosaic.version = 11 : i64} {
  func.func @_mlp_resident_kernel(%arg0: i32, %arg1: memref<8x32xbf16, #tpu.memory_space<vmem>>, %arg2: memref<32x128xbf16, #tpu.memory_space<vmem>>, %arg3: memref<1x128xf32, #tpu.memory_space<vmem>>, %arg4: memref<128x32xbf16, #tpu.memory_space<vmem>>, %arg5: memref<1x32xf32, #tpu.memory_space<vmem>>, %arg6: memref<8x32xf32, #tpu.memory_space<vmem>>) attributes {dimension_semantics = [#tpu.dimension_semantics<parallel>], iteration_bounds = array<i64: 2>, scalar_prefetch = 0 : i64, scratch_operands = 0 : i64, tpu.core_type = #tpu.core_type<tc>, window_params = [{transform_indices = @transform_0, window_bounds = array<i64: 8, 32>}, {pipeline_mode = #tpu.pipeline_mode<synchronous>, transform_indices = @transform_1, window_bounds = array<i64: 32, 128>}, {pipeline_mode = #tpu.pipeline_mode<synchronous>, transform_indices = @transform_2, window_bounds = array<i64: 1, 128>}, {pipeline_mode = #tpu.pipeline_mode<synchronous>, transform_indices = @transform_3, window_bounds = array<i64: 128, 32>}, {pipeline_mode = #tpu.pipeline_mode<synchronous>, transform_indices = @transform_4, window_bounds = array<i64: 1, 32>}, {transform_indices = @transform_5, window_bounds = array<i64: 8, 32>}]} {
    %c0 = arith.constant 0 : index
    %c0_0 = arith.constant 0 : index
    %0 = vector.load %arg1[%c0, %c0_0] : memref<8x32xbf16, #tpu.memory_space<vmem>>, vector<8x32xbf16>
    %c0_1 = arith.constant 0 : index
    %c0_2 = arith.constant 0 : index
    %1 = vector.load %arg2[%c0_1, %c0_2] : memref<32x128xbf16, #tpu.memory_space<vmem>>, vector<32x128xbf16>
    %cst = arith.constant dense<0.000000e+00> : vector<8x128xf32>
    %2 = tpu.matmul %0, %1, %cst {dimension_numbers = #tpu.dot_dimension_numbers<[1], [0], [0], [1], [0, 0, 1, 1], [], []>} : vector<8x32xbf16>, vector<32x128xbf16>, vector<8x128xf32> -> vector<8x128xf32>
    %c0_3 = arith.constant 0 : index
    %c0_4 = arith.constant 0 : index
    %3 = vector.load %arg3[%c0_3, %c0_4] : memref<1x128xf32, #tpu.memory_space<vmem>>, vector<1x128xf32>
    %4 = vector.broadcast %3 : vector<1x128xf32> to vector<8x128xf32>
    %5 = arith.addf %2, %4 : vector<8x128xf32>
    %cst_5 = arith.constant 5.000000e-01 : f32
    %6 = vector.broadcast %cst_5 : f32 to vector<8x128xf32>
    %7 = arith.mulf %6, %5 : vector<8x128xf32>
    %cst_6 = arith.constant 0.707106769 : f32
    %8 = vector.broadcast %cst_6 : f32 to vector<8x128xf32>
    %9 = arith.mulf %5, %8 : vector<8x128xf32>
    %10 = math.erf %9 : vector<8x128xf32>
    %cst_7 = arith.constant 1.000000e+00 : f32
    %11 = vector.broadcast %cst_7 : f32 to vector<8x128xf32>
    %12 = arith.addf %11, %10 : vector<8x128xf32>
    %13 = arith.mulf %7, %12 : vector<8x128xf32>
    %14 = arith.truncf %13 : vector<8x128xf32> to vector<8x128xbf16>
    %c0_8 = arith.constant 0 : index
    %c0_9 = arith.constant 0 : index
    %15 = vector.load %arg4[%c0_8, %c0_9] : memref<128x32xbf16, #tpu.memory_space<vmem>>, vector<128x32xbf16>
    %cst_10 = arith.constant dense<0.000000e+00> : vector<8x32xf32>
    %16 = tpu.matmul %14, %15, %cst_10 {dimension_numbers = #tpu.dot_dimension_numbers<[1], [0], [0], [1], [0, 0, 1, 1], [], []>} : vector<8x128xbf16>, vector<128x32xbf16>, vector<8x32xf32> -> vector<8x32xf32>
    %c0_11 = arith.constant 0 : index
    %c0_12 = arith.constant 0 : index
    %17 = vector.load %arg5[%c0_11, %c0_12] : memref<1x32xf32, #tpu.memory_space<vmem>>, vector<1x32xf32>
    %18 = vector.broadcast %17 : vector<1x32xf32> to vector<8x32xf32>
    %19 = arith.addf %16, %18 : vector<8x32xf32>
    %c0_13 = arith.constant 0 : index
    %c0_14 = arith.constant 0 : index
    %20 = vector.load %arg6[%c0_13, %c0_14] : memref<8x32xf32, #tpu.memory_space<vmem>>, vector<8x32xf32>
    tpu.vector_store %arg6[%c0_13, %c0_14], %19 {strides = array<i32>} : memref<8x32xf32, #tpu.memory_space<vmem>>, vector<8x32xf32>,
    return
  }
  func.func @transform_0(%arg0: i32) -> (i32, i32) {
    %c0_i32 = arith.constant 0 : i32
    %c0_i32_0 = arith.constant 0 : i32
    return %arg0, %c0_i32 : i32, i32
  }
  func.func @transform_1(%arg0: i32) -> (i32, i32) {
    %c0_i32 = arith.constant 0 : i32
    %c0_i32_0 = arith.constant 0 : i32
    %c0_i32_1 = arith.constant 0 : i32
    return %c0_i32, %c0_i32_0 : i32, i32
  }
  func.func @transform_2(%arg0: i32) -> (i32, i32) {
    %c0_i32 = arith.constant 0 : i32
    %c0_i32_0 = arith.constant 0 : i32
    %c0_i32_1 = arith.constant 0 : i32
    return %c0_i32, %c0_i32_0 : i32, i32
  }
  func.func @transform_3(%arg0: i32) -> (i32, i32) {
    %c0_i32 = arith.constant 0 : i32
    %c0_i32_0 = arith.constant 0 : i32
    %c0_i32_1 = arith.constant 0 : i32
    return %c0_i32, %c0_i32_0 : i32, i32
  }
  func.func @transform_4(%arg0: i32) -> (i32, i32) {
    %c0_i32 = arith.constant 0 : i32
    %c0_i32_0 = arith.constant 0 : i32
    %c0_i32_1 = arith.constant 0 : i32
    return %c0_i32, %c0_i32_0 : i32, i32
  }
  func.func @transform_5(%arg0: i32) -> (i32, i32) {
    %c0_i32 = arith.constant 0 : i32
    %c0_i32_0 = arith.constant 0 : i32
    return %arg0, %c0_i32 : i32, i32
  }
}

</mosaic_0001>

<llo_original>
// kernel: tpu_custom_call.1
$region0: #{tpu_custom_call.1}
  #allocation0 [shape = 'u32[]', space=smem, size = 0x4, offset = 0x4, fixed_abs, tag = 'smem constant byte address 0x4 - core index']
  #allocation1 [shape = 'u32[144,128]{1,0:T(1,128)}', space=vmem, size = 0x12000, scoped, tag = 'internal scratch']
  %s0 = inlined_call_operand.hbm [shape: f32[8,128], index: 0, kind: input, shape index: {}]
  %s1 = inlined_call_operand.hbm [shape: f32[8,128], index: 1, kind: output, shape index: {}]
  %s2 = sld [smem:[#allocation0]]
  $region18: #{tpu_custom_call.1} parent=0
    _
  %s4 = ssub.s32 1, %s2
  %s5 = scalar_select 0, %s4, %s2
  $region1: #{tpu_custom_call.1} parent=0
    #allocation2 [shape = 'u8[4096]{0}', space=vmem, size = 0x1000, scoped, tag = 'input window, operand 0, single buffered']
    #allocation3 [shape = 's32[1]{0}', space=sflag, size = 0x4, scoped, tag = 'scoped memory for tpu_custom_call.1']
    #allocation4 [shape = 's32[1]{0}', space=sflag, size = 0x4, scoped, tag = 'scoped memory for tpu_custom_call.1']
    #allocation5 [shape = 'u8[4096]{0}', space=vmem, size = 0x1000, scoped, tag = 'output window, operand 0, single buffered']
    %6 = vsyncpa [#allocation3], 0
    %7 = vsyncpa [#allocation4], 0
    // Predicated region
    $region2: #{tpu_custom_call.1} parent=1 // pred_check
      _
    $region3: #{tpu_custom_call.1} parent=1 // pred_check_branch
      %9 = sbr.rel (0) target = $region5
    $region4: #{tpu_custom_call.1} parent=1 // pred_region
      %s11 = ssub.s32 128, 128
      %12 = vsyncadd [#allocation3], %s11
      %s14 = sshll.u32 [#allocation2], 4
      %s15 = int_to_ptr.vmem [resolvable:$true] %s14
      %17 = dma.hbm_to_vmem [thread:$0]  %s0, 128, %s15, [#allocation3]
    $region5: #{tpu_custom_call.1} parent=1 // pred_fallthru
      _
    // Predicated region
    $region6: #{tpu_custom_call.1} parent=1 // pred_check
      _
    $region7: #{tpu_custom_call.1} parent=1 // pred_check_branch
      %19 = sbr.rel (0) target = $region9
    $region8: #{tpu_custom_call.1} parent=1 // pred_region
      %20 = dma.done [#allocation3], 128
    $region9: #{tpu_custom_call.1} parent=1 // pred_fallthru
      _
    %v21 = vld [vmem:[#allocation2] sm:$0xff]
    %22 = vst [vmem:[#allocation5] sm:$0xff] %v21
    // Predicated region
    $region10: #{tpu_custom_call.1} parent=1 // pred_check
      _
    $region11: #{tpu_custom_call.1} parent=1 // pred_check_branch
      %24 = sbr.rel (0) target = $region13
    $region12: #{tpu_custom_call.1} parent=1 // pred_region
      %s26 = ssub.s32 128, 128
      %27 = vsyncadd [#allocation4], %s26
      %s29 = sshll.u32 [#allocation5], 4
      %s30 = int_to_ptr.vmem [resolvable:$true] %s29
      %32 = dma.vmem_to_hbm [thread:$0]  %s30, 128, %s1, [#allocation4]
    $region13: #{tpu_custom_call.1} parent=1 // pred_fallthru
      _
    // Predicated region
    $region14: #{tpu_custom_call.1} parent=1 // pred_check
      _
    $region15: #{tpu_custom_call.1} parent=1 // pred_check_branch
      %34 = sbr.rel (0) target = $region17
    $region16: #{tpu_custom_call.1} parent=1 // pred_region
      %35 = dma.done [#allocation4], 128
    $region17: #{tpu_custom_call.1} parent=1 // pred_fallthru
      _
    %36 = vsyncpa [#allocation3], 1
    %37 = vsyncpa [#allocation4], 1

// kernel: tpu_custom_call.1
$region0: #{tpu_custom_call.1}
  #allocation0 [shape = 'u32[]', space=smem, size = 0x4, offset = 0x4, fixed_abs, tag = 'smem constant byte address 0x4 - core index']
  #allocation1 [shape = 'u32[144,128]{1,0:T(1,128)}', space=vmem, size = 0x12000, scoped, tag = 'internal scratch']
  %s0 = inlined_call_operand.vmem [shape: bf16[16,32], index: 0, kind: input, shape index: {}]
  %s1 = inlined_call_operand.vmem [shape: bf16[32,128], index: 1, kind: input, shape index: {}]
  %s2 = inlined_call_operand.vmem [shape: f32[1,128], index: 2, kind: input, shape index: {}]
  %s3 = inlined_call_operand.vmem [shape: bf16[128,32], index: 3, kind: input, shape index: {}]
  %s4 = inlined_call_operand.vmem [shape: f32[1,32], index: 4, kind: input, shape index: {}]
  %s5 = inlined_call_operand.hbm [shape: f32[16,32], index: 5, kind: output, shape index: {}]
  %s6 = sld [smem:[#allocation0]]
  $region53: #{tpu_custom_call.1} parent=0
    _
  %s8 = ssub.s32 1, %s6
  %s9 = scalar_select 0, %s8, %s6
  $region1: #{tpu_custom_call.1} parent=0
    #allocation2 [shape = 'u8[8192]{0}', space=vmem, size = 0x2000, scoped, tag = 'output window, operand 0']
    #allocation3 [shape = 's32[2]{0}', space=sflag, size = 0x8, scoped, tag = 'scoped memory for tpu_custom_call.1']
    %10 = vsyncpa [#allocation3], 0
    %s11 = scalar_lea.sflag [#allocation3], 1
    %12 = vsyncpa %s11, 0
    loop: start=0, step=1, limit=4
    $region2: #{tpu_custom_call.1} parent=1 // loop_pre_header
      _
    $region3: #{tpu_custom_call.1} parent=1 // loop_header
      %s14 = sphi 0, %s18
      %p15 = scmp.ge.s32.totalorder %s14, 4
      %s24 = sphi 0, %s26
      %s27 = sphi 0, %s24
      %s28 = sphi 0, %s27
      %s44 = sphi 0, %s28
      %s48 = sphi 0, %s48
      %s50 = sphi 0, %s48
      %s51 = sphi 0, %s50
      %s65 = sphi 0, %s51
      %s69 = sphi 0, %s69
      %s71 = sphi 0, %s69
      %s72 = sphi 0, %s71
      %s86 = sphi 0, %s72
      %s90 = sphi 0, %s90
      %s92 = sphi 0, %s90
      %s93 = sphi 0, %s92
      %s107 = sphi 0, %s93
      %s111 = sphi 0, %s111
      %s113 = sphi 0, %s111
      %s114 = sphi 0, %s113
      %s128 = sphi 0, %s114
      %s134 = sphi 0, %s136
      %s137 = sphi 0, %s134
      %s138 = sphi 0, %s137
      %s154 = sphi 0, %s138
    $region4: #{tpu_custom_call.1} parent=1 // loop_header_branch
      %17 = sbr.rel (%p15) target = $region8
    $region5: #{tpu_custom_call.1} parent=1 // loop_body
      %s19 = ssub.s32 %s14, 1
      %s20 = ssub.s32 %s14, 2
      %s21 = sadd.s32 %s14, 1
      %s22 = ssub.s32 %s14, %s21
      %p23 = scmp.eq.s32.totalorder %s22, 0
      %s25 = sadd.s32 %s24, 1
      %s26 = scalar_select %p23, %s24, %s25
      %p29 = pneg %p23
      %p30 = scmp.eq.s32.totalorder %s14, 1
      %p31 = por %p29, %p30
      %p32 = scmp.ne.s32.totalorder %s24, %s27
      %p33 = scmp.eq.s32.totalorder %s14, 0
      %p34 = por %p32, %p33
      %p35 = scmp.ne.s32.totalorder %s24, %s27
      %p36 = scmp.eq.s32.totalorder %s19, 1
      %p37 = por %p35, %p36
      %p38 = scmp.ne.s32.totalorder %s27, %s28
      %p39 = scmp.eq.s32.totalorder %s19, 0
      %p40 = por %p38, %p39
      %p41 = scmp.ne.s32.totalorder %s27, %s28
      %p42 = scmp.eq.s32.totalorder %s20, 1
      %p43 = por %p41, %p42
      %p45 = scmp.ne.s32.totalorder %s28, %s44
      %p46 = scmp.eq.s32.totalorder %s20, 0
      %p47 = por %p45, %p46
      %s49 = sadd.s32 %s48, 1
      %p52 = scmp.eq.s32.totalorder %s14, 1
      %p53 = scmp.ne.s32.totalorder %s48, %s50
      %p54 = scmp.eq.s32.totalorder %s14, 0
      %p55 = por %p53, %p54
      %p56 = scmp.ne.s32.totalorder %s48, %s50
      %p57 = scmp.eq.s32.totalorder %s19, 1
      %p58 = por %p56, %p57
      %p59 = scmp.ne.s32.totalorder %s50, %s51
      %p60 = scmp.eq.s32.totalorder %s19, 0
      %p61 = por %p59, %p60
      %p62 = scmp.ne.s32.totalorder %s50, %s51
      %p63 = scmp.eq.s32.totalorder %s20, 1
      %p64 = por %p62, %p63
      %p66 = scmp.ne.s32.totalorder %s51, %s65
      %p67 = scmp.eq.s32.totalorder %s20, 0
      %p68 = por %p66, %p67
      %s70 = sadd.s32 %s69, 1
      %p73 = scmp.eq.s32.totalorder %s14, 1
      %p74 = scmp.ne.s32.totalorder %s69, %s71
      %p75 = scmp.eq.s32.totalorder %s14, 0
      %p76 = por %p74, %p75
      %p77 = scmp.ne.s32.totalorder %s69, %s71
      %p78 = scmp.eq.s32.totalorder %s19, 1
      %p79 = por %p77, %p78
      %p80 = scmp.ne.s32.totalorder %s71, %s72
      %p81 = scmp.eq.s32.totalorder %s19, 0
      %p82 = por %p80, %p81
      %p83 = scmp.ne.s32.totalorder %s71, %s72
      %p84 = scmp.eq.s32.totalorder %s20, 1
      %p85 = por %p83, %p84
      %p87 = scmp.ne.s32.totalorder %s72, %s86
      %p88 = scmp.eq.s32.totalorder %s20, 0
      %p89 = por %p87, %p88
      %s91 = sadd.s32 %s90, 1
      %p94 = scmp.eq.s32.totalorder %s14, 1
      %p95 = scmp.ne.s32.totalorder %s90, %s92
      %p96 = scmp.eq.s32.totalorder %s14, 0
      %p97 = por %p95, %p96
      %p98 = scmp.ne.s32.totalorder %s90, %s92
      %p99 = scmp.eq.s32.totalorder %s19, 1
      %p100 = por %p98, %p99
      %p101 = scmp.ne.s32.totalorder %s92, %s93
      %p102 = scmp.eq.s32.totalorder %s19, 0
      %p103 = por %p101, %p102
      %p104 = scmp.ne.s32.totalorder %s92, %s93
      %p105 = scmp.eq.s32.totalorder %s20, 1
      %p106 = por %p104, %p105
      %p108 = scmp.ne.s32.totalorder %s93, %s107
      %p109 = scmp.eq.s32.totalorder %s20, 0
      %p110 = por %p108, %p109
      %s112 = sadd.s32 %s111, 1
      %p115 = scmp.eq.s32.totalorder %s14, 1
      %p116 = scmp.ne.s32.totalorder %s111, %s113
      %p117 = scmp.eq.s32.totalorder %s14, 0
      %p118 = por %p116, %p117
      %p119 = scmp.ne.s32.totalorder %s111, %s113
      %p120 = scmp.eq.s32.totalorder %s19, 1
      %p121 = por %p119, %p120
      %p122 = scmp.ne.s32.totalorder %s113, %s114
      %p123 = scmp.eq.s32.totalorder %s19, 0
      %p124 = por %p122, %p123
      %p125 = scmp.ne.s32.totalorder %s113, %s114
      %p126 = scmp.eq.s32.totalorder %s20, 1
      %p127 = por %p125, %p126
      %p129 = scmp.ne.s32.totalorder %s114, %s128
      %p130 = scmp.eq.s32.totalorder %s20, 0
      %p131 = por %p129, %p130
      %s132 = ssub.s32 %s14, %s21
      %p133 = scmp.eq.s32.totalorder %s132, 0
      %s135 = sadd.s32 %s134, 1
      %s136 = scalar_select %p133, %s134, %s135
      %p139 = pneg %p133
      %p140 = scmp.eq.s32.totalorder %s14, 1
      %p141 = por %p139, %p140
      %p142 = scmp.ne.s32.totalorder %s134, %s137
      %p143 = scmp.eq.s32.totalorder %s14, 0
      %p144 = por %p142, %p143
      %p145 = scmp.ne.s32.totalorder %s134, %s137
      %p146 = scmp.eq.s32.totalorder %s19, 1
      %p147 = por %p145, %p146
      %p148 = scmp.ne.s32.totalorder %s137, %s138
      %p149 = scmp.eq.s32.totalorder %s19, 0
      %p150 = por %p148, %p149
      %p151 = scmp.ne.s32.totalorder %s137, %s138
      %p152 = scmp.eq.s32.totalorder %s20, 1
      %p153 = por %p151, %p152
      %p155 = scmp.ne.s32.totalorder %s138, %s154
      %p156 = scmp.eq.s32.totalorder %s20, 0
      %p157 = por %p155, %p156
      %p158 = scmp.le.s32.totalorder 1, %s14
      %p159 = scmp.lt.s32.totalorder %s14, 3
      %p160 = pnand %p158, %p159
      %p161 = pneg %p160
      // Predicated region
      $region9: #{tpu_custom_call.1} parent=5 // pred_check
        _
      $region10: #{tpu_custom_call.1} parent=5 // pred_check_branch
        %163 = sbr.rel (%p160) target = $region12
      $region11: #{tpu_custom_call.1} parent=5 // pred_region
        %s164 = ssub.s32 %s14, 1
        // Predicated region
        $region13: #{tpu_custom_call.1} parent=11 // pred_check
          %p165 = pneg %p61
        $region14: #{tpu_custom_call.1} parent=11 // pred_check_branch
          %167 = sbr.rel (%p165) target = $region16
        $region15: #{tpu_custom_call.1} parent=11 // pred_region
          _
        $region16: #{tpu_custom_call.1} parent=11 // pred_fallthru
          _
        // Predicated region
        $region17: #{tpu_custom_call.1} parent=11 // pred_check
          %p168 = pneg %p82
        $region18: #{tpu_custom_call.1} parent=11 // pred_check_branch
          %170 = sbr.rel (%p168) target = $region20
        $region19: #{tpu_custom_call.1} parent=11 // pred_region
          _
        $region20: #{tpu_custom_call.1} parent=11 // pred_fallthru
          _
        // Predicated region
        $region21: #{tpu_custom_call.1} parent=11 // pred_check
          %p171 = pneg %p103
        $region22: #{tpu_custom_call.1} parent=11 // pred_check_branch
          %173 = sbr.rel (%p171) target = $region24
        $region23: #{tpu_custom_call.1} parent=11 // pred_region
          _
        $region24: #{tpu_custom_call.1} parent=11 // pred_fallthru
          _
        // Predicated region
        $region25: #{tpu_custom_call.1} parent=11 // pred_check
          %p174 = pneg %p124
        $region26: #{tpu_custom_call.1} parent=11 // pred_check_branch
          %176 = sbr.rel (%p174) target = $region28
        $region27: #{tpu_custom_call.1} parent=11 // pred_region
          _
        $region28: #{tpu_custom_call.1} parent=11 // pred_fallthru
          _
      $region12: #{tpu_custom_call.1} parent=5 // pred_fallthru
        _
      %p177 = scmp.lt.s32.totalorder %s14, 2
      // Predicated region
      $region29: #{tpu_custom_call.1} parent=5 // pred_check
        %p178 = pneg %p177
      $region30: #{tpu_custom_call.1} parent=5 // pred_check_branch
        %180 = sbr.rel (%p178) target = $region32
      $region31: #{tpu_custom_call.1} parent=5 // pred_region
        // Predicated region
        $region33: #{tpu_custom_call.1} parent=31 // pred_check
          %p181 = pneg %p34
        $region34: #{tpu_custom_call.1} parent=31 // pred_check_branch
          %183 = sbr.rel (%p181) target = $region36
        $region35: #{tpu_custom_call.1} parent=31 // pred_region
          %p184 = scmp.lt.s32.totalorder %s14, 1
          %s185 = scalar_select %p184, %s14, 1
          %s186 = smul.addr %s185, 4
          %s187 = scalar_lea.vmem %s0, %s186
        $region36: #{tpu_custom_call.1} parent=31 // pred_fallthru
          _
      $region32: #{tpu_custom_call.1} parent=5 // pred_fallthru
        _
      %p188 = scmp.le.s32.totalorder 1, %s14
      %p189 = scmp.lt.s32.totalorder %s14, 3
      %p190 = pnand %p188, %p189
      %p191 = pneg %p190
      // Predicated region
      $region37: #{tpu_custom_call.1} parent=5 // pred_check
        _
      $region38: #{tpu_custom_call.1} parent=5 // pred_check_branch
        %193 = sbr.rel (%p190) target = $region40
      $region39: #{tpu_custom_call.1} parent=5 // pred_region
        %s194 = ssub.s32 %s14, 1
        %p195 = scmp.lt.s32.totalorder %s19, 1
        %s196 = scalar_select %p195, %s19, 1
        %s197 = smul.addr %s196, 4
        %s198 = scalar_lea.vmem %s0, %s197
        %p199 = pneg %p40
        %p200 = pneg %p37
        %p201 = pneg %p61
        %p202 = pneg %p58
        %p203 = pneg %p82
        %p204 = pneg %p79
        %p205 = pneg %p103
        %p206 = pneg %p100
        %p207 = pneg %p124
        %p208 = pneg %p121
        %p209 = pneg %p150
        %p210 = pneg %p147
        %s211 = sand.u32 %s137, 1
        %s212 = scalar_lea.sflag [#allocation3], %s211
        %s213 = sand.u32 %s137, 1
        %s214 = smul.addr %s213, 8
        %s215 = scalar_lea.vmem [#allocation2], %s214
        %p216 = scmp.lt.s32.totalorder %s19, 1
        %s217 = scalar_select %p216, %s19, 1
        %s218 = smul.addr %s217, 4
        %s219 = scalar_lea.vmem %s0, %s218
        %v221 = vld [vmem:[%s219] sm:$0xf]
        %v222 = vld [vmem:[%s1] sm:$0xf]
        %v223 = vld [vmem:[%s1 + $0x4] sm:$0xf]
        %v224 = vld [vmem:[%s1 + $0x8] sm:$0xf]
        %v225 = vld [vmem:[%s1 + $0xc] sm:$0xf]
        %v226 = vld [vmem:[%s2] sm:$0x1]
        %v228 = vlaneseq
        %v229 = vshrl.u32 %v228, 7
        %v230 = vsub.s32 0, %v229
        %v231 = vrot.slane %v226, %v230
        %v237 = vunpack.c.l.b16 %v222
        %v238 = vunpack.c.l.b16 %v223
        %v239 = vunpack.c.l.b16 %v224
        %v240 = vunpack.c.l.b16 %v225
        %v241 = vpack.c.b16 %v238, %v237
        %v242 = vpack.c.b16 %v240, %v239
        %vm245 = vcmask 261120
        %v247 = vsel %vm245, %v221, 0
        %249 = vmatprep.subr.bf16.mxu0 0
        %250 = vmatpush1.bf16.msra.mxu0 %v241
        %251 = vmatprep.subr.bf16.mxu0 0
        %252 = vmatpush1.bf16.msra.mxu0 %v242
        %253 = vmatprep.subr.bf16.mxu0 0
        %254 = vmatpush1.bf16.msra.mxu0 0
        %255 = vmatprep.subr.bf16.mxu0 0
        %256 = vmatpush1.bf16.msra.mxu0 0
        %257 = vmatprep.subr.bf16.mxu0 0
        %258 = vmatpush1.bf16.msra.mxu0 0
        %259 = vmatprep.subr.bf16.mxu0 0
        %260 = vmatpush1.bf16.msra.mxu0 0
        %261 = vmatprep.subr.bf16.mxu0 0
        %262 = vmatpush1.bf16.msra.mxu0 0
        %263 = vmatprep.subr.bf16.mxu0 0
        %264 = vmatpush1.bf16.msra.mxu0 0
        %265 = vmatprep.subr.bf16.mxu0 0
        %266 = vmatpush1.bf16.msra.mxu0 0
        %267 = vmatprep.subr.bf16.mxu0 0
        %268 = vmatpush1.bf16.msra.mxu0 0
        %269 = vmatprep.subr.bf16.mxu0 0
        %270 = vmatpush1.bf16.msra.mxu0 0
        %271 = vmatprep.subr.bf16.mxu0 0
        %272 = vmatpush1.bf16.msra.mxu0 0
        %273 = vmatprep.subr.bf16.mxu0 0
        %274 = vmatpush1.bf16.msra.mxu0 0
        %275 = vmatprep.subr.bf16.mxu0 0
        %276 = vmatpush1.bf16.msra.mxu0 0
        %277 = vmatprep.subr.bf16.mxu0 0
        %278 = vmatpush1.bf16.msra.mxu0 0
        %279 = vmatprep.subr.bf16.mxu0 0
        %280 = vmatpush1.bf16.msra.mxu0 0
        %281 = vmatprep.mubr.bf16.mxu0 0
        %282 = vmatmul.mubr.bf16.gmra.mrb[0].mxu0 %v247
        %v283 = vpop.f32.mrb[0].mxu0
        %v284 = vadd.f32 %v231, %v283
        %v285 = vpop.f32.mrb[0].mxu0
        %v286 = vpop.f32.mrb[0].mxu0
        %v287 = vpop.f32.mrb[0].mxu0
        %288 = vdwg.mxu0
        %v289 = vmul.f32 %v284, 0.5
        %v290 = vmul.f32 %v284, 0.70710677
        %v291 = verf.f32.pop %v290
        %v292 = vadd.f32 %v291, 1.0
        %v293 = vmul.f32 %v289, %v292
        %v294 = vpack.c.bf16 %v293, %v293
        %v295 = vld [vmem:[%s3] sm:$0xf]
        %v296 = vld [vmem:[%s3 + $0x4] sm:$0xf]
        %v297 = vld [vmem:[%s3 + $0x8] sm:$0xf]
        %v298 = vld [vmem:[%s3 + $0xc] sm:$0xf]
        %v299 = vld [vmem:[%s3 + $0x10] sm:$0xf]
        %v300 = vld [vmem:[%s3 + $0x14] sm:$0xf]
        %v301 = vld [vmem:[%s3 + $0x18] sm:$0xf]
        %v302 = vld [vmem:[%s3 + $0x1c] sm:$0xf]
        %v303 = vld [vmem:[%s3 + $0x20] sm:$0xf]
        %v304 = vld [vmem:[%s3 + $0x24] sm:$0xf]
        %v305 = vld [vmem:[%s3 + $0x28] sm:$0xf]
        %v306 = vld [vmem:[%s3 + $0x2c] sm:$0xf]
        %v307 = vld [vmem:[%s3 + $0x30] sm:$0xf]
        %v308 = vld [vmem:[%s3 + $0x34] sm:$0xf]
        %v309 = vld [vmem:[%s3 + $0x38] sm:$0xf]
        %v310 = vld [vmem:[%s3 + $0x3c] sm:$0xf]
        %v311 = vld [vmem:[%s4] sm:$0x1]
        %v313 = vlaneseq
        %v314 = vshrl.u32 %v313, 7
        %v315 = vsub.s32 0, %v314
        %v316 = vrot.slane %v311, %v315
        %v334 = vunpack.c.l.b16 %v295
        %v335 = vunpack.c.l.b16 %v296
        %v336 = vunpack.c.l.b16 %v297
        %v337 = vunpack.c.l.b16 %v298
        %v338 = vunpack.c.l.b16 %v299
        %v339 = vunpack.c.l.b16 %v300
        %v340 = vunpack.c.l.b16 %v301
        %v341 = vunpack.c.l.b16 %v302
        %v342 = vunpack.c.l.b16 %v303
        %v343 = vunpack.c.l.b16 %v304
        %v344 = vunpack.c.l.b16 %v305
        %v345 = vunpack.c.l.b16 %v306
        %v346 = vunpack.c.l.b16 %v307
        %v347 = vunpack.c.l.b16 %v308
        %v348 = vunpack.c.l.b16 %v309
        %v349 = vunpack.c.l.b16 %v310
        %v350 = vpack.c.b16 %v335, %v334
        %v351 = vpack.c.b16 %v337, %v336
        %v352 = vpack.c.b16 %v339, %v338
        %v353 = vpack.c.b16 %v341, %v340
        %v354 = vpack.c.b16 %v343, %v342
        %v355 = vpack.c.b16 %v345, %v344
        %v356 = vpack.c.b16 %v347, %v346
        %v357 = vpack.c.b16 %v349, %v348
        %366 = vmatprep.subr.bf16.mxu0 0
        %367 = vmatpush1.bf16.msra.mxu0 %v350
        %368 = vmatprep.subr.bf16.mxu0 0
        %369 = vmatpush1.bf16.msra.mxu0 %v351
        %370 = vmatprep.subr.bf16.mxu0 0
        %371 = vmatpush1.bf16.msra.mxu0 %v352
        %372 = vmatprep.subr.bf16.mxu0 0
        %373 = vmatpush1.bf16.msra.mxu0 %v353
        %374 = vmatprep.subr.bf16.mxu0 0
        %375 = vmatpush1.bf16.msra.mxu0 %v354
        %376 = vmatprep.subr.bf16.mxu0 0
        %377 = vmatpush1.bf16.msra.mxu0 %v355
        %378 = vmatprep.subr.bf16.mxu0 0
        %379 = vmatpush1.bf16.msra.mxu0 %v356
        %380 = vmatprep.subr.bf16.mxu0 0
        %381 = vmatpush1.bf16.msra.mxu0 %v357
        %382 = vmatprep.subr.bf16.mxu0 0
        %383 = vmatpush1.bf16.msra.mxu0 0
        %384 = vmatprep.subr.bf16.mxu0 0
        %385 = vmatpush1.bf16.msra.mxu0 0
        %386 = vmatprep.subr.bf16.mxu0 0
        %387 = vmatpush1.bf16.msra.mxu0 0
        %388 = vmatprep.subr.bf16.mxu0 0
        %389 = vmatpush1.bf16.msra.mxu0 0
        %390 = vmatprep.subr.bf16.mxu0 0
        %391 = vmatpush1.bf16.msra.mxu0 0
        %392 = vmatprep.subr.bf16.mxu0 0
        %393 = vmatpush1.bf16.msra.mxu0 0
        %394 = vmatprep.subr.bf16.mxu0 0
        %395 = vmatpush1.bf16.msra.mxu0 0
        %396 = vmatprep.subr.bf16.mxu0 0
        %397 = vmatpush1.bf16.msra.mxu0 0
        %398 = vmatprep.mubr.bf16.mxu0 0
        %399 = vmatmul.mubr.bf16.gmra.mrb[0].mxu0 %v294
        %v400 = vpop.f32.mrb[0].mxu0
        %v401 = vadd.f32 %v316, %v400
        %v402 = vpop.f32.mrb[0].mxu0
        %v403 = vpop.f32.mrb[0].mxu0
        %v404 = vpop.f32.mrb[0].mxu0
        %405 = vdwg.mxu0
        %406 = vst.msk [vmem:[%s215] sm:$0xff] %vm245, %v401
        %s407 = sand.u32 %s137, 1
        %s408 = scalar_lea.sflag [#allocation3], %s407
        %s409 = sand.u32 %s137, 1
        %s410 = smul.addr %s409, 8
        %s411 = scalar_lea.vmem [#allocation2], %s410
        // Predicated region
        $region41: #{tpu_custom_call.1} parent=39 // pred_check
          %p412 = pneg %p147
        $region42: #{tpu_custom_call.1} parent=39 // pred_check_branch
          %414 = sbr.rel (%p412) target = $region44
        $region43: #{tpu_custom_call.1} parent=39 // pred_region
          %s416 = ssub.s32 128, 128
          %417 = vsyncadd %s408, %s416
          %s418 = smul.addr %s19, 128
          %s419 = scalar_lea.hbm %s5, %s418
          %s421 = sshll.u32 %s411, 4
          %s422 = int_to_ptr.vmem [resolvable:$true] %s421
          %424 = dma.vmem_to_hbm [thread:$0]  %s422, 128, %s419, %s408
        $region44: #{tpu_custom_call.1} parent=39 // pred_fallthru
          _
      $region40: #{tpu_custom_call.1} parent=5 // pred_fallthru
        _
      %p425 = scmp.le.s32.totalorder 2, %s14
      // Predicated region
      $region45: #{tpu_custom_call.1} parent=5 // pred_check
        %p426 = pneg %p425
      $region46: #{tpu_custom_call.1} parent=5 // pred_check_branch
        %428 = sbr.rel (%p426) target = $region48
      $region47: #{tpu_custom_call.1} parent=5 // pred_region
        %s429 = ssub.s32 %s14, 2
        // Predicated region
        $region49: #{tpu_custom_call.1} parent=47 // pred_check
          %p430 = pneg %p153
        $region50: #{tpu_custom_call.1} parent=47 // pred_check_branch
          %432 = sbr.rel (%p430) target = $region52
        $region51: #{tpu_custom_call.1} parent=47 // pred_region
          %s433 = sand.u32 %s138, 1
          %s434 = scalar_lea.sflag [#allocation3], %s433
          %s435 = sand.u32 %s138, 1
          %s436 = smul.addr %s435, 8
          %s437 = scalar_lea.vmem [#allocation2], %s436
          %438 = dma.done %s434, 128
        $region52: #{tpu_custom_call.1} parent=47 // pred_fallthru
          _
      $region48: #{tpu_custom_call.1} parent=5 // pred_fallthru
        _
    $region6: #{tpu_custom_call.1} parent=1 // loop_footer
      %s18 = sadd.s32 1, %s14
    $region7: #{tpu_custom_call.1} parent=1 // loop_footer_branch
      %13 = sbr.rel target = $region3
    $region8: #{tpu_custom_call.1} parent=1 // loop_exit
      _
    %439 = vsyncpa [#allocation3], 1
    %s440 = scalar_lea.sflag [#allocation3], 1
    %441 = vsyncpa %s440, 1

</llo_original>
